<compile_context>
chip_gen: v6e
topology: v6e:2x2x1
jax: 0.10.0
libtpu: 0.0.40
codegen_flags: <defaults>
</compile_context>

<pallas_src>
import functools

import jax
import jax.numpy as jnp
from jax.experimental import pallas as pl
from jax.experimental.pallas import tpu as pltpu


def _cdiv(a, b):
    return -(-a // b)


def _round_up(x, m):
    return ((x + m - 1) // m) * m


def _mixup_ce_kernel(meta_ref, logits_ref, out_ref, *, batch, tile):
    """One batch tile: partial sum of per-sample mixup CE losses -> (1, 8, 128) slab."""
    i = pl.program_id(0)

    x = logits_ref[...]                                     # [TB, C] native dtype
    meta = meta_ref[...]                                    # [TB, 3] int32
    a = meta[:, 0:1]                                        # [TB, 1] int32
    b = meta[:, 1:2]                                        # [TB, 1] int32
    lam = pltpu.bitcast(meta[:, 2:3], jnp.float32)          # [TB, 1] f32

    # One-hot picks in the native dtype (exact: one element per row survives the
    # select), combined with the f32 mixing weight only on the [TB, 1] results.
    ids = jax.lax.broadcasted_iota(jnp.int32, x.shape, 1)   # [TB, C]
    zero = jnp.zeros((), x.dtype)
    pick_a = jnp.sum(jnp.where(ids == a, x, zero), axis=-1, keepdims=True)
    pick_b = jnp.sum(jnp.where(ids == b, x, zero), axis=-1, keepdims=True)
    picked = (lam * pick_a.astype(jnp.float32)
              + (1.0 - lam) * pick_b.astype(jnp.float32))   # [TB, 1] f32

    # Numerically-stable log-sum-exp: max in native dtype (exact), exp/sum/log in f32.
    m = jnp.max(x, axis=-1, keepdims=True).astype(jnp.float32)        # [TB, 1]
    e = jnp.exp(x.astype(jnp.float32) - m)                            # [TB, C] f32
    lse = jnp.log(jnp.sum(e, axis=-1, keepdims=True)) + m             # [TB, 1]

    d = lse - picked                                                  # [TB, 1]

    # Mask rows past the true batch size (the ragged last tile reads undefined
    # rows -- a select keeps any NaN/Inf there out of the sum).
    row = jax.lax.broadcasted_iota(jnp.int32, d.shape, 0) + i * tile
    d = jnp.where(row < batch, d, 0.0)

    # Lane-dense (1, 8, 128) partial-sum slab; tiny final reduction done in JAX.
    out_ref[...] = jnp.full(out_ref.shape, jnp.sum(d), dtype=jnp.float32)


def _vmem_limit_bytes():
    """Scoped-VMEM request: ~half of physical VMEM (64 MiB on v5e/v6e, 32 MiB on v7x)."""
    cap = 128 * 1024 * 1024
    try:
        cap = int(pltpu.get_tpu_info().vmem_capacity_bytes)
    except Exception:
        pass
    return max(32 * 1024 * 1024, min(64 * 1024 * 1024, cap // 2))


def _choose_tile(B, C, itemsize, vmem_limit):
    """Rows per grid step: as large as the VMEM budget allows, >= 2 steps if possible."""
    c_lanes = _round_up(max(C, 1), 128)        # lane padding when C % 128 != 0
    # live VMEM per step ~= 2 double-buffered native logits blocks
    #                      + ~4 f32-sized blocks of in-kernel intermediates
    bytes_per_row = c_lanes * (2 * itemsize + 4 * 4)
    budget_rows = int(0.7 * vmem_limit) // bytes_per_row
    tile = max(8, (budget_rows // 8) * 8)
    # >= 2 grid steps where the batch allows it: lets double buffering overlap
    # and gives both v7x TensorCores work on the "parallel" axis.
    tile = min(tile, _round_up(_cdiv(B, 2), 8))
    tile = min(tile, _round_up(B, 8))
    return max(8, tile)


def mixup_loss(output, target, *, reduction="mean", tile=None):
    """output: [B, C] logits (any float dtype); target: [B, 3] (a, b, lam) or [B] labels.

    Returns the scalar mixup cross-entropy loss (float32); reduction in
    {'mean', 'sum'}.  Labels carried in a float [B, 3] target are exact only
    below 2**24 (same as the PyTorch module's `.long()` cast of a float tensor).
    """
    B, C = output.shape

    if target.ndim == 1:
        a = target.astype(jnp.int32)
        b = a
        lam = jnp.ones((B,), jnp.float32)
    else:
        a = target[:, 0].astype(jnp.int32)
        b = target[:, 1].astype(jnp.int32)
        lam = target[:, 2].astype(jnp.float32)
    # Pack (a, b, lam) into one int32 [B, 3] array -> one small DMA per grid step.
    meta = jnp.stack([a, b, jax.lax.bitcast_convert_type(lam, jnp.int32)], axis=1)

    itemsize = jnp.dtype(output.dtype).itemsize
    vmem_limit = _vmem_limit_bytes()
    if tile is None:
        tile = _choose_tile(B, C, itemsize, vmem_limit)
    tile = max(8, (int(tile) // 8) * 8)
    tile = min(tile, _round_up(max(B, 8), 8))

    # Pallas handles the ragged last block (grid = cdiv) with in-kernel masking;
    # only batches smaller than one sublane group get a (tiny) pad.
    if B < 8:
        pad = 8 - B
        output = jnp.pad(output, ((0, pad), (0, 0)))
        meta = jnp.pad(meta, ((0, pad), (0, 0)))
    rows = output.shape[0]
    n_tiles = _cdiv(rows, tile)

    block_bytes = tile * _round_up(C, 128) * itemsize
    if n_tiles >= 3 and block_bytes < (1 << 20):
        # Many short steps with tiny blocks: 3-deep pipeline hides DMA issue latency.
        logits_spec = pl.BlockSpec((tile, C), lambda i: (i, 0),
                                   pipeline_mode=pl.Buffered(3))
    else:
        logits_spec = pl.BlockSpec((tile, C), lambda i: (i, 0))

    kernel = functools.partial(_mixup_ce_kernel, batch=B, tile=tile)

    partials = pl.pallas_call(
        kernel,
        out_shape=jax.ShapeDtypeStruct((n_tiles, 8, 128), jnp.float32),
        grid_spec=pltpu.PrefetchScalarGridSpec(
            num_scalar_prefetch=0,
            grid=(n_tiles,),
            in_specs=[
                pl.BlockSpec((tile, 3), lambda i: (i, 0)),   # packed (a, b, lam)
                logits_spec,                                 # logits, native dtype
            ],
            out_specs=pl.BlockSpec((1, 8, 128), lambda i: (i, 0, 0)),
        ),
        compiler_params=pltpu.CompilerParams(
            dimension_semantics=("parallel",),
            vmem_limit_bytes=vmem_limit,
        ),
    )(meta, output)

    total = jnp.sum(partials[:, 0, 0])
    if reduction == "mean":
        return total / B
    elif reduction == "sum":
        return total
    else:
        # TODO(synk): reduction='none' (per-sample vector) not implemented.
        raise NotImplementedError("only 'mean' and 'sum' reductions are implemented")


def _reference_mixup_loss(output, target):
    # pure-JAX reference of the PyTorch module (mean reduction, CE crit)
    logp = jax.nn.log_softmax(output.astype(jnp.float32), axis=-1)
    if target.ndim == 2:
        a = target[:, 0].astype(jnp.int32)
        b = target[:, 1].astype(jnp.int32)
        lam = target[:, 2].astype(jnp.float32)
        l1 = -jnp.take_along_axis(logp, a[:, None], axis=1)[:, 0]
        l2 = -jnp.take_along_axis(logp, b[:, None], axis=1)[:, 0]
        d = l1 * lam + l2 * (1.0 - lam)
    else:
        t = target.astype(jnp.int32)
        d = -jnp.take_along_axis(logp, t[:, None], axis=1)[:, 0]
    return jnp.mean(d)


if __name__ == "__main__":
    key = jax.random.PRNGKey(0)

    def run_case(B, C, dtype, mixup, atol, tile=None):
        ks = jax.random.split(jax.random.fold_in(key, B * 1000 + C), 4)
        logits = jax.random.normal(ks[0], (B, C), dtype=jnp.float32).astype(dtype)
        label_a = jax.random.randint(ks[1], (B,), 0, C)
        label_b = jax.random.randint(ks[2], (B,), 0, C)
        lam = jax.random.uniform(ks[3], (B,), dtype=jnp.float32)
        if mixup:
            target = jnp.stack(
                [label_a.astype(jnp.float32), label_b.astype(jnp.float32), lam], axis=1
            )
        else:
            target = label_a
        got = jax.block_until_ready(mixup_loss(logits, target, tile=tile))
        want = _reference_mixup_loss(logits, target)
        assert jnp.allclose(got, want, atol=atol, rtol=1e-4), (
            B, C, str(dtype), mixup, got, want,
        )

    # mixup (2-D target) and plain (1-D target) paths, f32 logits
    run_case(8, 32, jnp.float32, True, 1e-5)
    run_case(8, 32, jnp.float32, False, 1e-5)
    # ragged batch (not a multiple of 8): un-padded logits + in-kernel row mask
    run_case(13, 32, jnp.float32, True, 1e-5)
    # tiny batch (< one sublane group)
    run_case(5, 32, jnp.float32, True, 1e-5)
    # C not a multiple of 128: exercises lane masking of the class reductions
    run_case(13, 200, jnp.float32, True, 1e-5)
    # bf16 logits stay bf16 through load + pick pass; LSE accumulates in f32
    run_case(16, 32, jnp.bfloat16, True, 1e-3)
    # many small tiles: exercises the multi-step / Buffered(3) logits pipeline
    run_case(48, 32, jnp.float32, True, 1e-5, tile=8)

    print("KERNEL_OK")
</pallas_src>

<mosaic_0001>
module attributes {stable_mosaic.version = 11 : i64} {
  func.func @_mixup_ce_kernel(%arg0: i32, %arg1: memref<8x3xi32, #tpu.memory_space<vmem>>, %arg2: memref<8x32xf32, #tpu.memory_space<vmem>>, %arg3: memref<1x8x128xf32, #tpu.memory_space<vmem>>) attributes {dimension_semantics = [#tpu.dimension_semantics<parallel>], iteration_bounds = array<i64: 1>, scalar_prefetch = 0 : i64, scratch_operands = 0 : i64, tpu.core_type = #tpu.core_type<tc>, window_params = [{transform_indices = @transform_0, window_bounds = array<i64: 8, 3>}, {transform_indices = @transform_1, window_bounds = array<i64: 8, 32>}, {transform_indices = @transform_2, window_bounds = array<i64: 1, 8, 128>}]} {
    %c0 = arith.constant 0 : index
    %c0_0 = arith.constant 0 : index
    %0 = vector.load %arg2[%c0, %c0_0] : memref<8x32xf32, #tpu.memory_space<vmem>>, vector<8x32xf32>
    %c0_1 = arith.constant 0 : index
    %c0_2 = arith.constant 0 : index
    %1 = vector.load %arg1[%c0_1, %c0_2] : memref<8x3xi32, #tpu.memory_space<vmem>>, vector<8x3xi32>
    %2 = vector.extract_strided_slice %1 {offsets = [0, 0], sizes = [8, 1], strides = [1, 1]} : vector<8x3xi32> to vector<8x1xi32>
    %3 = vector.extract_strided_slice %1 {offsets = [0, 1], sizes = [8, 1], strides = [1, 1]} : vector<8x3xi32> to vector<8x1xi32>
    %4 = vector.extract_strided_slice %1 {offsets = [0, 2], sizes = [8, 1], strides = [1, 1]} : vector<8x3xi32> to vector<8x1xi32>
    %5 = tpu.bitcast %4 : vector<8x1xi32> -> vector<8x1xf32>
    %6 = tpu.iota {dimensions = array<i32: 1>} : vector<8x32xi32>
    %7 = vector.broadcast %2 : vector<8x1xi32> to vector<8x32xi32>
    %8 = arith.cmpi eq, %6, %7 : vector<8x32xi32>
    %cst = arith.constant 0.000000e+00 : f32
    %9 = vector.broadcast %cst : f32 to vector<8x32xf32>
    %10 = arith.select %8, %0, %9 : vector<8x32xi1>, vector<8x32xf32>
    %cst_3 = arith.constant dense<0.000000e+00> : vector<8xf32>
    %11 = vector.multi_reduction <add>, %10, %cst_3 [1] : vector<8x32xf32> to vector<8xf32>
    %12 = vector.shape_cast %11 : vector<8xf32> to vector<8x1xf32>
    %13 = vector.broadcast %3 : vector<8x1xi32> to vector<8x32xi32>
    %14 = arith.cmpi eq, %6, %13 : vector<8x32xi32>
    %cst_4 = arith.constant 0.000000e+00 : f32
    %15 = vector.broadcast %cst_4 : f32 to vector<8x32xf32>
    %16 = arith.select %14, %0, %15 : vector<8x32xi1>, vector<8x32xf32>
    %cst_5 = arith.constant dense<0.000000e+00> : vector<8xf32>
    %17 = vector.multi_reduction <add>, %16, %cst_5 [1] : vector<8x32xf32> to vector<8xf32>
    %18 = vector.shape_cast %17 : vector<8xf32> to vector<8x1xf32>
    %19 = arith.mulf %5, %12 : vector<8x1xf32>
    %cst_6 = arith.constant 1.000000e+00 : f32
    %20 = vector.broadcast %cst_6 : f32 to vector<8x1xf32>
    %21 = arith.subf %20, %5 : vector<8x1xf32>
    %22 = arith.mulf %21, %18 : vector<8x1xf32>
    %23 = arith.addf %19, %22 : vector<8x1xf32>
    %cst_7 = arith.constant dense<0xFF800000> : vector<8xf32>
    %24 = vector.multi_reduction <maximumf>, %0, %cst_7 [1] : vector<8x32xf32> to vector<8xf32>
    %25 = vector.shape_cast %24 : vector<8xf32> to vector<8x1xf32>
    %26 = vector.broadcast %25 : vector<8x1xf32> to vector<8x32xf32>
    %27 = arith.subf %0, %26 : vector<8x32xf32>
    %28 = math.exp %27 : vector<8x32xf32>
    %cst_8 = arith.constant dense<0.000000e+00> : vector<8xf32>
    %29 = vector.multi_reduction <add>, %28, %cst_8 [1] : vector<8x32xf32> to vector<8xf32>
    %30 = vector.shape_cast %29 : vector<8xf32> to vector<8x1xf32>
    %31 = math.log %30 : vector<8x1xf32>
    %32 = arith.addf %31, %25 : vector<8x1xf32>
    %33 = arith.subf %32, %23 : vector<8x1xf32>
    %34 = tpu.iota {dimensions = array<i32: 0>} : vector<8x1xi32>
    %c8_i32 = arith.constant 8 : i32
    %35 = arith.muli %arg0, %c8_i32 : i32
    %36 = vector.broadcast %35 : i32 to vector<8x1xi32>
    %37 = arith.addi %34, %36 : vector<8x1xi32>
    %c8_i32_9 = arith.constant 8 : i32
    %38 = vector.broadcast %c8_i32_9 : i32 to vector<8x1xi32>
    %39 = arith.cmpi slt, %37, %38 : vector<8x1xi32>
    %cst_10 = arith.constant 0.000000e+00 : f32
    %40 = vector.broadcast %cst_10 : f32 to vector<8x1xf32>
    %41 = arith.select %39, %33, %40 : vector<8x1xi1>, vector<8x1xf32>
    %42 = vector.shape_cast %41 : vector<8x1xf32> to vector<1x8x1xf32>
    %cst_11 = arith.constant dense<0.000000e+00> : vector<1xf32>
    %43 = vector.multi_reduction <add>, %42, %cst_11 [1, 2] : vector<1x8x1xf32> to vector<1xf32>
    %44 = vector.shape_cast %43 : vector<1xf32> to vector<1x1x1xf32>
    %45 = vector.extract %44[0, 0, 0] : f32 from vector<1x1x1xf32>
    %46 = vector.broadcast %45 : f32 to vector<1x8x128xf32>
    %c0_12 = arith.constant 0 : index
    %c0_13 = arith.constant 0 : index
    %c0_14 = arith.constant 0 : index
    %47 = vector.load %arg3[%c0_12, %c0_13, %c0_14] : memref<1x8x128xf32, #tpu.memory_space<vmem>>, vector<1x8x128xf32>
    tpu.vector_store %arg3[%c0_12, %c0_13, %c0_14], %46 {strides = array<i32>} : memref<1x8x128xf32, #tpu.memory_space<vmem>>, vector<1x8x128xf32>,
    return
  }
  func.func @transform_0(%arg0: i32) -> (i32, i32) {
    %c0_i32 = arith.constant 0 : i32
    %c0_i32_0 = arith.constant 0 : i32
    return %arg0, %c0_i32 : i32, i32
  }
  func.func @transform_1(%arg0: i32) -> (i32, i32) {
    %c0_i32 = arith.constant 0 : i32
    %c0_i32_0 = arith.constant 0 : i32
    return %arg0, %c0_i32 : i32, i32
  }
  func.func @transform_2(%arg0: i32) -> (i32, i32, i32) {
    %c0_i32 = arith.constant 0 : i32
    %c0_i32_0 = arith.constant 0 : i32
    %c0_i32_1 = arith.constant 0 : i32
    return %arg0, %c0_i32, %c0_i32_0 : i32, i32, i32
  }
}

</mosaic_0001>

<llo_original>
// kernel: tpu_custom_call.1
$region0: #{tpu_custom_call.1}
  #allocation0 [shape = 'u32[]', space=smem, size = 0x4, offset = 0x4, fixed_abs, tag = 'smem constant byte address 0x4 - core index']
  #allocation1 [shape = 'u32[144,128]{1,0:T(1,128)}', space=vmem, size = 0x12000, scoped, tag = 'internal scratch']
  %s0 = inlined_call_operand.vmem [shape: s32[8,3], index: 0, kind: input, shape index: {}]
  %s1 = inlined_call_operand.vmem [shape: f32[8,32], index: 1, kind: input, shape index: {}]
  %s2 = inlined_call_operand.hbm [shape: f32[1,8,128], index: 2, kind: output, shape index: {}]
  %s3 = sld [smem:[#allocation0]]
  $region18: #{tpu_custom_call.1} parent=0
    _
  %s5 = ssub.s32 1, %s3
  %s6 = scalar_select 0, %s5, %s3
  $region1: #{tpu_custom_call.1} parent=0
    #allocation2 [shape = 'u8[4096]{0}', space=vmem, size = 0x1000, scoped, tag = 'output window, operand 0, single buffered']
    #allocation3 [shape = 's32[1]{0}', space=sflag, size = 0x4, scoped, tag = 'scoped memory for tpu_custom_call.1']
    %7 = vsyncpa [#allocation3], 0
    // Predicated region
    $region2: #{tpu_custom_call.1} parent=1 // pred_check
      _
    $region3: #{tpu_custom_call.1} parent=1 // pred_check_branch
      %9 = sbr.rel (0) target = $region5
    $region4: #{tpu_custom_call.1} parent=1 // pred_region
      _
    $region5: #{tpu_custom_call.1} parent=1 // pred_fallthru
      _
    // Predicated region
    $region6: #{tpu_custom_call.1} parent=1 // pred_check
      _
    $region7: #{tpu_custom_call.1} parent=1 // pred_check_branch
      %11 = sbr.rel (0) target = $region9
    $region8: #{tpu_custom_call.1} parent=1 // pred_region
      _
    $region9: #{tpu_custom_call.1} parent=1 // pred_fallthru
      _
    %v12 = vld [vmem:[%s1] sm:$0xff]
    %v13 = vld [vmem:[%s0] sm:$0xff]
    %v15 = vlaneseq
    %v16 = vand.u32 %v15, 127
    %17 = vset.pattern.permute.xlu0 0
    %18 = vperm.xlu0 %17, %v13
    %v19 = vpop.permute.xlu0 %18
    %vm20 = vcmp.eq.s32.totalorder %v16, %v19
    %v21 = vsel %vm20, %v12, 0.0
    %vm22 = vcmask 261120
    %v23 = vsel %vm22, %v21, 0.0
    %24 = vadd.xlane.f32.xlu0 %v23
    %v25 = vpop.xlane.xlu0 %24
    %26 = vset.pattern.permute.xlu0 1
    %27 = vperm.xlu0 %26, %v13
    %v28 = vpop.permute.xlu0 %27
    %vm29 = vcmp.eq.s32.totalorder %v16, %v28
    %v30 = vsel %vm29, %v12, 0.0
    %v31 = vsel %vm22, %v30, 0.0
    %32 = vadd.xlane.f32.xlu0 %v31
    %v33 = vpop.xlane.xlu0 %32
    %v34 = vmul.f32 %v13, %v25
    %v35 = vsub.f32 1.0, %v13
    %v36 = vmul.f32 %v35, %v33
    %v37 = vadd.f32 %v34, %v36
    %v38 = vsel %vm22, %v12, -inf
    %39 = vmax.xlane.f32.xlu0 %v38
    %v40 = vpop.xlane.xlu0 %39
    %v41 = vsub.f32 %v12, %v40
    %v42 = vmul.f32 %v41, 1.442695
    %v43 = vpow.pop %v42
    %v44 = vsel %vm22, %v43, 0.0
    %45 = vadd.xlane.f32.xlu0 %v44
    %v46 = vpop.xlane.xlu0 %45
    %v47 = vlog2.pop %v46
    %v48 = vmul.f32 %v47, 0.6931472
    %v49 = vadd.f32 %v48, %v40
    %v50 = vsub.f32 %v49, %v37
    %v51 = vlaneseq
    %v52 = vshrl.u32 %v51, 7
    %s53 = smul.u32 0, 8
    %v54 = vstv %s53
    %v55 = vadd.s32 %v52, %v54
    %vm56 = vcmp.lt.s32.totalorder %v55, 8
    %v57 = vsel %vm56, %v50, 0.0
    %59 = vrot.lane.b32.xlu0 %v57, 126
    %v60 = vpop.permute.xlu0 %59
    %vm62 = vcmask 7168
    %v63 = vsel %vm62, %v60, 0.0
    %64 = vadd.xlane.f32.xlu0 %v63
    %v65 = vpop.xlane.xlu0 %64
    %v66 = vrot.slane %v65, 4
    %v67 = vadd.f32 %v65, %v66
    %v68 = vrot.slane %v67, 2
    %v69 = vadd.f32 %v67, %v68
    %v70 = vrot.slane %v69, 1
    %v71 = vadd.f32 %v69, %v70
    %s72 = vtos %v71
    %v73 = vstv %s72
    %74 = vst [vmem:[#allocation2] sm:$0xff] %v73
    // Predicated region
    $region10: #{tpu_custom_call.1} parent=1 // pred_check
      _
    $region11: #{tpu_custom_call.1} parent=1 // pred_check_branch
      %76 = sbr.rel (0) target = $region13
    $region12: #{tpu_custom_call.1} parent=1 // pred_region
      %s78 = ssub.s32 128, 128
      %79 = vsyncadd [#allocation3], %s78
      %s81 = sshll.u32 [#allocation2], 4
      %s82 = int_to_ptr.vmem [resolvable:$true] %s81
      %84 = dma.vmem_to_hbm [thread:$0]  %s82, 128, %s2, [#allocation3]
    $region13: #{tpu_custom_call.1} parent=1 // pred_fallthru
      _
    // Predicated region
    $region14: #{tpu_custom_call.1} parent=1 // pred_check
      _
    $region15: #{tpu_custom_call.1} parent=1 // pred_check_branch
      %86 = sbr.rel (0) target = $region17
    $region16: #{tpu_custom_call.1} parent=1 // pred_region
      %87 = dma.done [#allocation3], 128
    $region17: #{tpu_custom_call.1} parent=1 // pred_fallthru
      _
    %88 = vsyncpa [#allocation3], 1

</llo_original>
